<compile_context>
chip_gen: v7x
topology: tpu7x:2x2x1
jax: 0.10.0
libtpu: 0.0.40
codegen_flags: <defaults>
</compile_context>

<pallas_src>
import jax
import jax.numpy as jnp
from jax.experimental import pallas as pl
from jax.experimental.pallas import tpu as pltpu

input_size = 75
hidden1_size = 256
hidden2_size = 64
num_classes = 2

MAX_TB = 1024          # max batch tile (f32 stream -> multiple of 8 is enough)
SPLIT_THRESHOLD = 512  # split grid into >=2 steps above this B (v7x 2nd TC; tiles stay >=256)


def ecgnet_kernel(x_ref, w1_ref, b1_ref, w2_ref, b2_ref, w3_ref, b3_ref, out_ref):
    # x arrives as f32 (tb, 75); cast to bf16 in-kernel (MXU operands), accumulate in f32.
    x = x_ref[...].astype(jnp.bfloat16)
    # fc1 + relu1  (K=75: Mosaic pads the lane/sublane tiles internally)
    h1 = jnp.dot(x, w1_ref[...], preferred_element_type=jnp.float32)
    h1 = jnp.maximum(h1 + b1_ref[...], 0.0)
    # fc2 + relu2
    h2 = jnp.dot(h1.astype(jnp.bfloat16), w2_ref[...],
                 preferred_element_type=jnp.float32)
    h2 = jnp.maximum(h2 + b2_ref[...], 0.0)
    # fc3 (logits, N=2 -> small masked store, negligible vs. HBM savings)
    out = jnp.dot(h2.astype(jnp.bfloat16), w3_ref[...],
                  preferred_element_type=jnp.float32)
    out_ref[...] = (out + b3_ref[...]).astype(out_ref.dtype)


def _round_up(n, m):
    return (n + m - 1) // m * m


def _choose_tile(B):
    """Pick (tb, b_pad) so tiles are large, waste is bounded, and big batches
    produce >=2 grid steps (v7x megacore)."""
    steps = max(pl.cdiv(B, MAX_TB), 1)
    if B >= SPLIT_THRESHOLD and steps < 2:
        steps = 2
    tb = min(MAX_TB, _round_up(pl.cdiv(B, steps), 8))
    b_pad = _round_up(B, tb)
    return tb, b_pad


def prepare_params(w1, b1, w2, b2, w3, b3):
    """One-time (out-of-forward) cast: weights bf16, biases f32. Weights are (in, out)."""
    return (w1.astype(jnp.bfloat16), b1.astype(jnp.float32),
            w2.astype(jnp.bfloat16), b2.astype(jnp.float32),
            w3.astype(jnp.bfloat16), b3.astype(jnp.float32))


@jax.jit
def ecgnet_forward(x, w1, b1, w2, b2, w3, b3):
    """x: (B, input_size) f32. w*: bf16 (in, out) from prepare_params; b*: f32 (1, out)."""
    B = x.shape[0]
    tb, b_pad = _choose_tile(B)
    if b_pad != B:  # only pad the batch axis (padded rows compute garbage, sliced off)
        x = jnp.pad(x, ((0, b_pad - B), (0, 0)))

    grid = (b_pad // tb,)
    const = lambda i: (0, 0)  # weights/biases: fetched once, resident across the grid

    flops = 2 * b_pad * (input_size * hidden1_size
                         + hidden1_size * hidden2_size
                         + hidden2_size * num_classes)
    bytes_accessed = (b_pad * input_size * 4                 # x stream (f32)
                      + b_pad * num_classes * 4              # out stream (f32, 2 cols)
                      + (input_size * hidden1_size
                         + hidden1_size * hidden2_size
                         + hidden2_size * num_classes) * 2   # weights (bf16, resident)
                      + (hidden1_size + hidden2_size + num_classes) * 4)  # biases (f32)

    out = pl.pallas_call(
        ecgnet_kernel,
        out_shape=jax.ShapeDtypeStruct((b_pad, num_classes), jnp.float32),
        grid=grid,
        in_specs=[
            pl.BlockSpec((tb, input_size), lambda i: (i, 0)),     # x  (streamed per tile)
            pl.BlockSpec((input_size, hidden1_size), const),      # w1 (resident)
            pl.BlockSpec((1, hidden1_size), const),               # b1
            pl.BlockSpec((hidden1_size, hidden2_size), const),    # w2
            pl.BlockSpec((1, hidden2_size), const),               # b2
            pl.BlockSpec((hidden2_size, num_classes), const),     # w3
            pl.BlockSpec((1, num_classes), const),                # b3
        ],
        out_specs=pl.BlockSpec((tb, num_classes), lambda i: (i, 0)),
        compiler_params=pltpu.CompilerParams(
            dimension_semantics=("parallel",),
            vmem_limit_bytes=64 * 1024 * 1024,
        ),
        cost_estimate=pl.CostEstimate(flops=flops,
                                      bytes_accessed=bytes_accessed,
                                      transcendentals=0),
    )(x, w1, b1, w2, b2, w3, b3)

    return out[:B]


def init_params(key):
    # Deterministic init mimicking nn.Linear's uniform(-1/sqrt(fan_in), 1/sqrt(fan_in)).
    ks = jax.random.split(key, 6)

    def linear(kw, kb, fan_in, fan_out):
        bound = 1.0 / jnp.sqrt(jnp.float32(fan_in))
        w = jax.random.uniform(kw, (fan_in, fan_out), jnp.float32, -bound, bound)
        b = jax.random.uniform(kb, (1, fan_out), jnp.float32, -bound, bound)
        return w, b

    w1, b1 = linear(ks[0], ks[1], input_size, hidden1_size)
    w2, b2 = linear(ks[2], ks[3], hidden1_size, hidden2_size)
    w3, b3 = linear(ks[4], ks[5], hidden2_size, num_classes)
    return w1, b1, w2, b2, w3, b3


if __name__ == "__main__":
    key = jax.random.PRNGKey(0)
    k_x, k_p = jax.random.split(key)

    batch = 8
    x = jax.random.normal(k_x, (batch, input_size), dtype=jnp.float32)
    w1, b1, w2, b2, w3, b3 = init_params(k_p)

    # One-time weight prep (bf16 cast) outside the per-call forward.
    p = prepare_params(w1, b1, w2, b2, w3, b3)

    out = ecgnet_forward(x, *p)
    out = jax.block_until_ready(out)
    assert out.shape == (batch, num_classes)

    # Reference with the same bf16 casts / f32 accumulation as the kernel.
    h1 = jnp.maximum(
        jnp.dot(x.astype(jnp.bfloat16), w1.astype(jnp.bfloat16),
                preferred_element_type=jnp.float32) + b1, 0.0)
    h2 = jnp.maximum(
        jnp.dot(h1.astype(jnp.bfloat16), w2.astype(jnp.bfloat16),
                preferred_element_type=jnp.float32) + b2, 0.0)
    ref = jnp.dot(h2.astype(jnp.bfloat16), w3.astype(jnp.bfloat16),
                  preferred_element_type=jnp.float32) + b3
    assert jnp.allclose(out, ref, atol=1e-2, rtol=1e-2)

    # Loose sanity check against full-f32 math (bf16 quantization noise only).
    h1f = jnp.maximum(x @ w1 + b1, 0.0)
    h2f = jnp.maximum(h1f @ w2 + b2, 0.0)
    ref_f32 = h2f @ w3 + b3
    assert jnp.allclose(out, ref_f32, atol=5e-2, rtol=5e-2)

    print("KERNEL_OK")
</pallas_src>

<mosaic_0001>
module attributes {stable_mosaic.version = 11 : i64} {
  func.func @ecgnet_kernel(%arg0: i32, %arg1: memref<8x75xf32, #tpu.memory_space<vmem>>, %arg2: memref<75x256xbf16, #tpu.memory_space<vmem>>, %arg3: memref<1x256xf32, #tpu.memory_space<vmem>>, %arg4: memref<256x64xbf16, #tpu.memory_space<vmem>>, %arg5: memref<1x64xf32, #tpu.memory_space<vmem>>, %arg6: memref<64x2xbf16, #tpu.memory_space<vmem>>, %arg7: memref<1x2xf32, #tpu.memory_space<vmem>>, %arg8: memref<8x2xf32, #tpu.memory_space<vmem>>) attributes {dimension_semantics = [#tpu.dimension_semantics<parallel>], iteration_bounds = array<i64: 1>, scalar_prefetch = 0 : i64, scratch_operands = 0 : i64, tpu.core_type = #tpu.core_type<tc>, window_params = [{transform_indices = @transform_0, window_bounds = array<i64: 8, 75>}, {pipeline_mode = #tpu.pipeline_mode<synchronous>, transform_indices = @transform_1, window_bounds = array<i64: 75, 256>}, {pipeline_mode = #tpu.pipeline_mode<synchronous>, transform_indices = @transform_2, window_bounds = array<i64: 1, 256>}, {pipeline_mode = #tpu.pipeline_mode<synchronous>, transform_indices = @transform_3, window_bounds = array<i64: 256, 64>}, {pipeline_mode = #tpu.pipeline_mode<synchronous>, transform_indices = @transform_4, window_bounds = array<i64: 1, 64>}, {pipeline_mode = #tpu.pipeline_mode<synchronous>, transform_indices = @transform_5, window_bounds = array<i64: 64, 2>}, {pipeline_mode = #tpu.pipeline_mode<synchronous>, transform_indices = @transform_6, window_bounds = array<i64: 1, 2>}, {transform_indices = @transform_7, window_bounds = array<i64: 8, 2>}]} {
    %c0 = arith.constant 0 : index
    %c0_0 = arith.constant 0 : index
    %0 = vector.load %arg1[%c0, %c0_0] : memref<8x75xf32, #tpu.memory_space<vmem>>, vector<8x75xf32>
    %1 = arith.truncf %0 : vector<8x75xf32> to vector<8x75xbf16>
    %c0_1 = arith.constant 0 : index
    %c0_2 = arith.constant 0 : index
    %2 = vector.load %arg2[%c0_1, %c0_2] : memref<75x256xbf16, #tpu.memory_space<vmem>>, vector<75x256xbf16>
    %cst = arith.constant dense<0.000000e+00> : vector<8x256xf32>
    %3 = tpu.matmul %1, %2, %cst {dimension_numbers = #tpu.dot_dimension_numbers<[1], [0], [0], [1], [0, 0, 1, 1], [], []>} : vector<8x75xbf16>, vector<75x256xbf16>, vector<8x256xf32> -> vector<8x256xf32>
    %c0_3 = arith.constant 0 : index
    %c0_4 = arith.constant 0 : index
    %4 = vector.load %arg3[%c0_3, %c0_4] : memref<1x256xf32, #tpu.memory_space<vmem>>, vector<1x256xf32>
    %5 = vector.broadcast %4 : vector<1x256xf32> to vector<8x256xf32>
    %6 = arith.addf %3, %5 : vector<8x256xf32>
    %cst_5 = arith.constant 0.000000e+00 : f32
    %7 = vector.broadcast %cst_5 : f32 to vector<8x256xf32>
    %8 = arith.maximumf %6, %7 : vector<8x256xf32>
    %9 = arith.truncf %8 : vector<8x256xf32> to vector<8x256xbf16>
    %c0_6 = arith.constant 0 : index
    %c0_7 = arith.constant 0 : index
    %10 = vector.load %arg4[%c0_6, %c0_7] : memref<256x64xbf16, #tpu.memory_space<vmem>>, vector<256x64xbf16>
    %cst_8 = arith.constant dense<0.000000e+00> : vector<8x64xf32>
    %11 = tpu.matmul %9, %10, %cst_8 {dimension_numbers = #tpu.dot_dimension_numbers<[1], [0], [0], [1], [0, 0, 1, 1], [], []>} : vector<8x256xbf16>, vector<256x64xbf16>, vector<8x64xf32> -> vector<8x64xf32>
    %c0_9 = arith.constant 0 : index
    %c0_10 = arith.constant 0 : index
    %12 = vector.load %arg5[%c0_9, %c0_10] : memref<1x64xf32, #tpu.memory_space<vmem>>, vector<1x64xf32>
    %13 = vector.broadcast %12 : vector<1x64xf32> to vector<8x64xf32>
    %14 = arith.addf %11, %13 : vector<8x64xf32>
    %cst_11 = arith.constant 0.000000e+00 : f32
    %15 = vector.broadcast %cst_11 : f32 to vector<8x64xf32>
    %16 = arith.maximumf %14, %15 : vector<8x64xf32>
    %17 = arith.truncf %16 : vector<8x64xf32> to vector<8x64xbf16>
    %c0_12 = arith.constant 0 : index
    %c0_13 = arith.constant 0 : index
    %18 = vector.load %arg6[%c0_12, %c0_13] : memref<64x2xbf16, #tpu.memory_space<vmem>>, vector<64x2xbf16>
    %cst_14 = arith.constant dense<0.000000e+00> : vector<8x2xf32>
    %19 = tpu.matmul %17, %18, %cst_14 {dimension_numbers = #tpu.dot_dimension_numbers<[1], [0], [0], [1], [0, 0, 1, 1], [], []>} : vector<8x64xbf16>, vector<64x2xbf16>, vector<8x2xf32> -> vector<8x2xf32>
    %c0_15 = arith.constant 0 : index
    %c0_16 = arith.constant 0 : index
    %20 = vector.load %arg7[%c0_15, %c0_16] : memref<1x2xf32, #tpu.memory_space<vmem>>, vector<1x2xf32>
    %21 = vector.broadcast %20 : vector<1x2xf32> to vector<8x2xf32>
    %22 = arith.addf %19, %21 : vector<8x2xf32>
    %c0_17 = arith.constant 0 : index
    %c0_18 = arith.constant 0 : index
    %23 = vector.load %arg8[%c0_17, %c0_18] : memref<8x2xf32, #tpu.memory_space<vmem>>, vector<8x2xf32>
    tpu.vector_store %arg8[%c0_17, %c0_18], %22 {strides = array<i32>} : memref<8x2xf32, #tpu.memory_space<vmem>>, vector<8x2xf32>,
    return
  }
  func.func @transform_0(%arg0: i32) -> (i32, i32) {
    %c0_i32 = arith.constant 0 : i32
    %c0_i32_0 = arith.constant 0 : i32
    return %arg0, %c0_i32 : i32, i32
  }
  func.func @transform_1(%arg0: i32) -> (i32, i32) {
    %c0_i32 = arith.constant 0 : i32
    %c0_i32_0 = arith.constant 0 : i32
    %c0_i32_1 = arith.constant 0 : i32
    return %c0_i32, %c0_i32_0 : i32, i32
  }
  func.func @transform_2(%arg0: i32) -> (i32, i32) {
    %c0_i32 = arith.constant 0 : i32
    %c0_i32_0 = arith.constant 0 : i32
    %c0_i32_1 = arith.constant 0 : i32
    return %c0_i32, %c0_i32_0 : i32, i32
  }
  func.func @transform_3(%arg0: i32) -> (i32, i32) {
    %c0_i32 = arith.constant 0 : i32
    %c0_i32_0 = arith.constant 0 : i32
    %c0_i32_1 = arith.constant 0 : i32
    return %c0_i32, %c0_i32_0 : i32, i32
  }
  func.func @transform_4(%arg0: i32) -> (i32, i32) {
    %c0_i32 = arith.constant 0 : i32
    %c0_i32_0 = arith.constant 0 : i32
    %c0_i32_1 = arith.constant 0 : i32
    return %c0_i32, %c0_i32_0 : i32, i32
  }
  func.func @transform_5(%arg0: i32) -> (i32, i32) {
    %c0_i32 = arith.constant 0 : i32
    %c0_i32_0 = arith.constant 0 : i32
    %c0_i32_1 = arith.constant 0 : i32
    return %c0_i32, %c0_i32_0 : i32, i32
  }
  func.func @transform_6(%arg0: i32) -> (i32, i32) {
    %c0_i32 = arith.constant 0 : i32
    %c0_i32_0 = arith.constant 0 : i32
    %c0_i32_1 = arith.constant 0 : i32
    return %c0_i32, %c0_i32_0 : i32, i32
  }
  func.func @transform_7(%arg0: i32) -> (i32, i32) {
    %c0_i32 = arith.constant 0 : i32
    %c0_i32_0 = arith.constant 0 : i32
    return %arg0, %c0_i32 : i32, i32
  }
}

</mosaic_0001>

<llo_original>
// kernel: ecgnet_forward.1
$region0: #{ecgnet_forward.1}
  #allocation0 [shape = 'u32[]', space=smem, size = 0x4, offset = 0x4, fixed_abs, tag = 'smem constant byte address 0x4 - core index']
  #allocation1 [shape = 'u32[144,128]{1,0:T(1,128)}', space=vmem, size = 0x12000, scoped, tag = 'internal scratch']
  %s0 = inlined_call_operand.hbm [shape: f32[8,75], index: 0, kind: input, shape index: {}]
  %s1 = inlined_call_operand.hbm [shape: bf16[75,256], index: 1, kind: input, shape index: {}]
  %s2 = inlined_call_operand.hbm [shape: f32[1,256], index: 2, kind: input, shape index: {}]
  %s3 = inlined_call_operand.hbm [shape: bf16[256,64], index: 3, kind: input, shape index: {}]
  %s4 = inlined_call_operand.hbm [shape: f32[1,64], index: 4, kind: input, shape index: {}]
  %s5 = inlined_call_operand.hbm [shape: bf16[64,2], index: 5, kind: input, shape index: {}]
  %s6 = inlined_call_operand.hbm [shape: f32[1,2], index: 6, kind: input, shape index: {}]
  %s7 = inlined_call_operand.hbm [shape: f32[8,2], index: 7, kind: output, shape index: {}]
  %s8 = sld [smem:[#allocation0]]
  $region66: #{ecgnet_forward.1} parent=0
    _
  %s10 = ssub.s32 1, %s8
  %s11 = scalar_select 0, %s10, %s8
  $region1: #{ecgnet_forward.1} parent=0
    #allocation2 [shape = 'u8[4096]{0}', space=vmem, size = 0x1000, scoped, tag = 'input window, operand 0, single buffered']
    #allocation3 [shape = 's32[1]{0}', space=sflag, size = 0x4, scoped, tag = 'scoped memory for ecgnet_forward.1']
    #allocation4 [shape = 's32[1]{0}', space=sflag, size = 0x4, scoped, tag = 'scoped memory for ecgnet_forward.1']
    #allocation5 [shape = 'u8[40960]{0}', space=vmem, size = 0xa000, scoped, tag = 'input window, operand 1, single buffered']
    #allocation6 [shape = 's32[1]{0}', space=sflag, size = 0x4, scoped, tag = 'scoped memory for ecgnet_forward.1']
    #allocation7 [shape = 'u8[1024]{0}', space=vmem, size = 0x400, scoped, tag = 'input window, operand 2, single buffered']
    #allocation8 [shape = 'u8[65536]{0}', space=vmem, size = 0x10000, scoped, tag = 'input window, operand 3, single buffered']
    #allocation9 [shape = 's32[1]{0}', space=sflag, size = 0x4, scoped, tag = 'scoped memory for ecgnet_forward.1']
    #allocation10 [shape = 'u8[512]{0}', space=vmem, size = 0x400, scoped, tag = 'input window, operand 4, single buffered']
    #allocation11 [shape = 'u8[16384]{0}', space=vmem, size = 0x4000, scoped, tag = 'input window, operand 5, single buffered']
    #allocation12 [shape = 's32[1]{0}', space=sflag, size = 0x4, scoped, tag = 'scoped memory for ecgnet_forward.1']
    #allocation13 [shape = 'u8[512]{0}', space=vmem, size = 0x400, scoped, tag = 'input window, operand 6, single buffered']
    #allocation14 [shape = 'u8[4096]{0}', space=vmem, size = 0x1000, scoped, tag = 'output window, operand 0, single buffered']
    %12 = vsyncpa [#allocation3], 0
    %13 = vsyncpa [#allocation6], 0
    %14 = vsyncpa [#allocation9], 0
    %15 = vsyncpa [#allocation12], 0
    %16 = vsyncpa [#allocation4], 0
    // Predicated region
    $region2: #{ecgnet_forward.1} parent=1 // pred_check
      _
    $region3: #{ecgnet_forward.1} parent=1 // pred_check_branch
      %18 = sbr.rel (0) target = $region5
    $region4: #{ecgnet_forward.1} parent=1 // pred_region
      %s20 = ssub.s32 128, 128
      %21 = vsyncadd [#allocation3], %s20
      %s23 = sshll.u32 [#allocation2], 4
      %s24 = int_to_ptr.vmem [resolvable:$true] %s23
      %26 = dma.hbm_to_vmem [thread:$0]  %s0, 128, %s24, [#allocation3]
    $region5: #{ecgnet_forward.1} parent=1 // pred_fallthru
      _
    // Predicated region
    $region6: #{ecgnet_forward.1} parent=1 // pred_check
      _
    $region7: #{ecgnet_forward.1} parent=1 // pred_check_branch
      %28 = sbr.rel (0) target = $region9
    $region8: #{ecgnet_forward.1} parent=1 // pred_region
      %s30 = ssub.s32 1280, 1280
      %31 = vsyncadd [#allocation6], %s30
      %s32 = sshll.u32 [#allocation5], 4
      %s33 = int_to_ptr.vmem [resolvable:$true] %s32
      %38 = dma.hbm_to_vmem [thread:$0]  %s1, 1280, %s33, [#allocation6], 128, 128, 8
    $region9: #{ecgnet_forward.1} parent=1 // pred_fallthru
      _
    // Predicated region
    $region10: #{ecgnet_forward.1} parent=1 // pred_check
      _
    $region11: #{ecgnet_forward.1} parent=1 // pred_check_branch
      %40 = sbr.rel (0) target = $region13
    $region12: #{ecgnet_forward.1} parent=1 // pred_region
      %s42 = ssub.s32 32, 32
      %43 = vsyncadd [#allocation6], %s42
      %s45 = sshll.u32 [#allocation7], 4
      %s46 = int_to_ptr.vmem [resolvable:$true] %s45
      %48 = dma.hbm_to_vmem [thread:$0]  %s2, 32, %s46, [#allocation6]
    $region13: #{ecgnet_forward.1} parent=1 // pred_fallthru
      _
    // Predicated region
    $region14: #{ecgnet_forward.1} parent=1 // pred_check
      _
    $region15: #{ecgnet_forward.1} parent=1 // pred_check_branch
      %50 = sbr.rel (0) target = $region17
    $region16: #{ecgnet_forward.1} parent=1 // pred_region
      %s52 = ssub.s32 2048, 2048
      %53 = vsyncadd [#allocation9], %s52
      %s54 = sshll.u32 [#allocation8], 4
      %s55 = int_to_ptr.vmem [resolvable:$true] %s54
      %60 = dma.hbm_to_vmem [thread:$0]  %s3, 2048, %s55, [#allocation9], 64, 64, 4
    $region17: #{ecgnet_forward.1} parent=1 // pred_fallthru
      _
    // Predicated region
    $region18: #{ecgnet_forward.1} parent=1 // pred_check
      _
    $region19: #{ecgnet_forward.1} parent=1 // pred_check_branch
      %62 = sbr.rel (0) target = $region21
    $region20: #{ecgnet_forward.1} parent=1 // pred_region
      %s64 = ssub.s32 16, 16
      %65 = vsyncadd [#allocation9], %s64
      %s67 = sshll.u32 [#allocation10], 4
      %s68 = int_to_ptr.vmem [resolvable:$true] %s67
      %70 = dma.hbm_to_vmem [thread:$0]  %s4, 16, %s68, [#allocation9]
    $region21: #{ecgnet_forward.1} parent=1 // pred_fallthru
      _
    // Predicated region
    $region22: #{ecgnet_forward.1} parent=1 // pred_check
      _
    $region23: #{ecgnet_forward.1} parent=1 // pred_check_branch
      %72 = sbr.rel (0) target = $region25
    $region24: #{ecgnet_forward.1} parent=1 // pred_region
      %s74 = ssub.s32 512, 512
      %75 = vsyncadd [#allocation12], %s74
      %s76 = sshll.u32 [#allocation11], 4
      %s77 = int_to_ptr.vmem [resolvable:$true] %s76
      %82 = dma.hbm_to_vmem [thread:$0]  %s5, 512, %s77, [#allocation12], 64, 64, 4
    $region25: #{ecgnet_forward.1} parent=1 // pred_fallthru
      _
    // Predicated region
    $region26: #{ecgnet_forward.1} parent=1 // pred_check
      _
    $region27: #{ecgnet_forward.1} parent=1 // pred_check_branch
      %84 = sbr.rel (0) target = $region29
    $region28: #{ecgnet_forward.1} parent=1 // pred_region
      %s86 = ssub.s32 16, 16
      %87 = vsyncadd [#allocation12], %s86
      %s89 = sshll.u32 [#allocation13], 4
      %s90 = int_to_ptr.vmem [resolvable:$true] %s89
      %92 = dma.hbm_to_vmem [thread:$0]  %s6, 16, %s90, [#allocation12]
    $region29: #{ecgnet_forward.1} parent=1 // pred_fallthru
      _
    // Predicated region
    $region30: #{ecgnet_forward.1} parent=1 // pred_check
      _
    $region31: #{ecgnet_forward.1} parent=1 // pred_check_branch
      %94 = sbr.rel (0) target = $region33
    $region32: #{ecgnet_forward.1} parent=1 // pred_region
      %95 = dma.done [#allocation3], 128
    $region33: #{ecgnet_forward.1} parent=1 // pred_fallthru
      _
    // Predicated region
    $region34: #{ecgnet_forward.1} parent=1 // pred_check
      _
    $region35: #{ecgnet_forward.1} parent=1 // pred_check_branch
      %97 = sbr.rel (0) target = $region37
    $region36: #{ecgnet_forward.1} parent=1 // pred_region
      %98 = dma.done [#allocation6], 1280
    $region37: #{ecgnet_forward.1} parent=1 // pred_fallthru
      _
    // Predicated region
    $region38: #{ecgnet_forward.1} parent=1 // pred_check
      _
    $region39: #{ecgnet_forward.1} parent=1 // pred_check_branch
      %100 = sbr.rel (0) target = $region41
    $region40: #{ecgnet_forward.1} parent=1 // pred_region
      %101 = dma.done [#allocation6], 32
    $region41: #{ecgnet_forward.1} parent=1 // pred_fallthru
      _
    // Predicated region
    $region42: #{ecgnet_forward.1} parent=1 // pred_check
      _
    $region43: #{ecgnet_forward.1} parent=1 // pred_check_branch
      %103 = sbr.rel (0) target = $region45
    $region44: #{ecgnet_forward.1} parent=1 // pred_region
      %104 = dma.done [#allocation9], 2048
    $region45: #{ecgnet_forward.1} parent=1 // pred_fallthru
      _
    // Predicated region
    $region46: #{ecgnet_forward.1} parent=1 // pred_check
      _
    $region47: #{ecgnet_forward.1} parent=1 // pred_check_branch
      %106 = sbr.rel (0) target = $region49
    $region48: #{ecgnet_forward.1} parent=1 // pred_region
      %107 = dma.done [#allocation9], 16
    $region49: #{ecgnet_forward.1} parent=1 // pred_fallthru
      _
    // Predicated region
    $region50: #{ecgnet_forward.1} parent=1 // pred_check
      _
    $region51: #{ecgnet_forward.1} parent=1 // pred_check_branch
      %109 = sbr.rel (0) target = $region53
    $region52: #{ecgnet_forward.1} parent=1 // pred_region
      %110 = dma.done [#allocation12], 512
    $region53: #{ecgnet_forward.1} parent=1 // pred_fallthru
      _
    // Predicated region
    $region54: #{ecgnet_forward.1} parent=1 // pred_check
      _
    $region55: #{ecgnet_forward.1} parent=1 // pred_check_branch
      %112 = sbr.rel (0) target = $region57
    $region56: #{ecgnet_forward.1} parent=1 // pred_region
      %113 = dma.done [#allocation12], 16
    $region57: #{ecgnet_forward.1} parent=1 // pred_fallthru
      _
    %v115 = vld [vmem:[#allocation2] sm:$0xff]
    %v116 = vpack.c.bf16 %v115, %v115
    %v117 = vld [vmem:[#allocation5] sm:$0xff]
    %v118 = vld [vmem:[#allocation5 + $0x8] sm:$0xff]
    %v119 = vld [vmem:[#allocation5 + $0x10] sm:$0xff]
    %v120 = vld [vmem:[#allocation5 + $0x18] sm:$0xff]
    %v121 = vld [vmem:[#allocation5 + $0x20] sm:$0xff]
    %v122 = vld [vmem:[#allocation5 + $0x28] sm:$0xff]
    %v123 = vld [vmem:[#allocation5 + $0x30] sm:$0xff]
    %v124 = vld [vmem:[#allocation5 + $0x38] sm:$0xff]
    %v125 = vld [vmem:[#allocation5 + $0x40] sm:$0xff]
    %v126 = vld [vmem:[#allocation5 + $0x48] sm:$0x33]
    %v127 = vld [vmem:[#allocation7] sm:$0x3]
    %v129 = vlaneseq
    %v130 = vshrl.u32 %v129, 7
    %v131 = vsub.s32 0, %v130
    %v132 = vrot.slane %v127, %v131
    %v133 = vlaneseq
    %v134 = vshrl.u32 %v133, 7
    %v135 = vsub.s32 1, %v134
    %v136 = vrot.slane %v127, %v135
    %v149 = vunpack.c.l.b16 %v117
    %v150 = vunpack.c.h.b16 %v117
    %v151 = vunpack.c.l.b16 %v118
    %v152 = vunpack.c.h.b16 %v118
    %v153 = vunpack.c.l.b16 %v119
    %v154 = vunpack.c.h.b16 %v119
    %v155 = vunpack.c.l.b16 %v120
    %v156 = vunpack.c.h.b16 %v120
    %v157 = vunpack.c.l.b16 %v121
    %v158 = vunpack.c.h.b16 %v121
    %v159 = vunpack.c.l.b16 %v122
    %v160 = vunpack.c.h.b16 %v122
    %v161 = vunpack.c.l.b16 %v123
    %v162 = vunpack.c.h.b16 %v123
    %v163 = vunpack.c.l.b16 %v124
    %v164 = vunpack.c.h.b16 %v124
    %v165 = vunpack.c.l.b16 %v125
    %v166 = vunpack.c.h.b16 %v125
    %v167 = vunpack.c.l.b16 %v126
    %v168 = vunpack.c.h.b16 %v126
    %v169 = vpack.c.b16 %v151, %v149
    %v170 = vpack.c.b16 %v152, %v150
    %v171 = vpack.c.b16 %v155, %v153
    %v172 = vpack.c.b16 %v156, %v154
    %v173 = vpack.c.b16 %v159, %v157
    %v174 = vpack.c.b16 %v160, %v158
    %v175 = vpack.c.b16 %v163, %v161
    %v176 = vpack.c.b16 %v164, %v162
    %v177 = vpack.c.b16 %v167, %v165
    %v178 = vpack.c.b16 %v168, %v166
    %vm187 = vcmask 613376
    %v189 = vsel %vm187, %v116, 0
    %vm191 = vcmask 1044480
    %vm192 = vcmask 1045504
    %v193 = vsel %vm191, 4294967295, 65535
    %v194 = vsel %vm192, %v193, 0
    %v196 = vand.u32 %v177, %v194
    %v199 = vand.u32 %v178, %v194
    %201 = vmatprep.subr.bf16.mxu0 %v170
    %202 = vmatpush1.bf16.msra.mxu0 %v169
    %203 = vmatprep.subr.bf16.mxu0 %v172
    %204 = vmatpush1.bf16.msra.mxu0 %v171
    %205 = vmatprep.subr.bf16.mxu0 %v174
    %206 = vmatpush1.bf16.msra.mxu0 %v173
    %207 = vmatprep.subr.bf16.mxu0 %v176
    %208 = vmatpush1.bf16.msra.mxu0 %v175
    %209 = vmatprep.subr.bf16.mxu0 %v199
    %210 = vmatpush1.bf16.msra.mxu0 %v196
    %211 = vmatprep.subr.bf16.mxu0 0
    %212 = vmatpush1.bf16.msra.mxu0 0
    %213 = vmatprep.subr.bf16.mxu0 0
    %214 = vmatpush1.bf16.msra.mxu0 0
    %215 = vmatprep.subr.bf16.mxu0 0
    %216 = vmatpush1.bf16.msra.mxu0 0
    %217 = vmatprep.subr.bf16.mxu0 0
    %218 = vmatpush1.bf16.msra.mxu0 0
    %219 = vmatprep.subr.bf16.mxu0 0
    %220 = vmatpush1.bf16.msra.mxu0 0
    %221 = vmatprep.subr.bf16.mxu0 0
    %222 = vmatpush1.bf16.msra.mxu0 0
    %223 = vmatprep.subr.bf16.mxu0 0
    %224 = vmatpush1.bf16.msra.mxu0 0
    %225 = vmatprep.subr.bf16.mxu0 0
    %226 = vmatpush1.bf16.msra.mxu0 0
    %227 = vmatprep.subr.bf16.mxu0 0
    %228 = vmatpush1.bf16.msra.mxu0 0
    %229 = vmatprep.subr.bf16.mxu0 0
    %230 = vmatpush1.bf16.msra.mxu0 0
    %231 = vmatprep.subr.bf16.mxu0 0
    %232 = vmatpush1.bf16.msra.mxu0 0
    %233 = vmatprep.mubr.bf16.mxu0 0
    %234 = vmatmul.mubr.bf16.gmra.mrb[0].mxu0 %v189
    %v235 = vpop.f32.mrb[0].mxu0
    %v236 = vadd.f32 %v132, %v235
    %v237 = vpop.f32.mrb[0].mxu0
    %v238 = vadd.f32 %v136, %v237
    %v239 = vpop.f32.mrb[0].mxu0
    %v240 = vpop.f32.mrb[0].mxu0
    %241 = vdwg.mxu0
    %v242 = vmax.f32 %v236, 0.0
    %v243 = vmax.f32 %v238, 0.0
    %v244 = vpack.c.bf16 %v242, %v242
    %v245 = vpack.c.bf16 %v243, %v243
    %v246 = vld [vmem:[#allocation8] sm:$0xf]
    %v247 = vld [vmem:[#allocation8 + $0x4] sm:$0xf]
    %v248 = vld [vmem:[#allocation8 + $0x8] sm:$0xf]
    %v249 = vld [vmem:[#allocation8 + $0xc] sm:$0xf]
    %v250 = vld [vmem:[#allocation8 + $0x10] sm:$0xf]
    %v251 = vld [vmem:[#allocation8 + $0x14] sm:$0xf]
    %v252 = vld [vmem:[#allocation8 + $0x18] sm:$0xf]
    %v253 = vld [vmem:[#allocation8 + $0x1c] sm:$0xf]
    %v254 = vld [vmem:[#allocation8 + $0x20] sm:$0xf]
    %v255 = vld [vmem:[#allocation8 + $0x24] sm:$0xf]
    %v256 = vld [vmem:[#allocation8 + $0x28] sm:$0xf]
    %v257 = vld [vmem:[#allocation8 + $0x2c] sm:$0xf]
    %v258 = vld [vmem:[#allocation8 + $0x30] sm:$0xf]
    %v259 = vld [vmem:[#allocation8 + $0x34] sm:$0xf]
    %v260 = vld [vmem:[#allocation8 + $0x38] sm:$0xf]
    %v261 = vld [vmem:[#allocation8 + $0x3c] sm:$0xf]
    %v262 = vld [vmem:[#allocation8 + $0x40] sm:$0xf]
    %v263 = vld [vmem:[#allocation8 + $0x44] sm:$0xf]
    %v264 = vld [vmem:[#allocation8 + $0x48] sm:$0xf]
    %v265 = vld [vmem:[#allocation8 + $0x4c] sm:$0xf]
    %v266 = vld [vmem:[#allocation8 + $0x50] sm:$0xf]
    %v267 = vld [vmem:[#allocation8 + $0x54] sm:$0xf]
    %v268 = vld [vmem:[#allocation8 + $0x58] sm:$0xf]
    %v269 = vld [vmem:[#allocation8 + $0x5c] sm:$0xf]
    %v270 = vld [vmem:[#allocation8 + $0x60] sm:$0xf]
    %v271 = vld [vmem:[#allocation8 + $0x64] sm:$0xf]
    %v272 = vld [vmem:[#allocation8 + $0x68] sm:$0xf]
    %v273 = vld [vmem:[#allocation8 + $0x6c] sm:$0xf]
    %v274 = vld [vmem:[#allocation8 + $0x70] sm:$0xf]
    %v275 = vld [vmem:[#allocation8 + $0x74] sm:$0xf]
    %v276 = vld [vmem:[#allocation8 + $0x78] sm:$0xf]
    %v277 = vld [vmem:[#allocation8 + $0x7c] sm:$0xf]
    %v278 = vld [vmem:[#allocation10] sm:$0x1]
    %v280 = vlaneseq
    %v281 = vshrl.u32 %v280, 7
    %v282 = vsub.s32 0, %v281
    %v283 = vrot.slane %v278, %v282
    %v317 = vunpack.c.l.b16 %v246
    %v318 = vunpack.c.l.b16 %v247
    %v319 = vunpack.c.l.b16 %v248
    %v320 = vunpack.c.l.b16 %v249
    %v321 = vunpack.c.l.b16 %v250
    %v322 = vunpack.c.l.b16 %v251
    %v323 = vunpack.c.l.b16 %v252
    %v324 = vunpack.c.l.b16 %v253
    %v325 = vunpack.c.l.b16 %v254
    %v326 = vunpack.c.l.b16 %v255
    %v327 = vunpack.c.l.b16 %v256
    %v328 = vunpack.c.l.b16 %v257
    %v329 = vunpack.c.l.b16 %v258
    %v330 = vunpack.c.l.b16 %v259
    %v331 = vunpack.c.l.b16 %v260
    %v332 = vunpack.c.l.b16 %v261
    %v333 = vunpack.c.l.b16 %v262
    %v334 = vunpack.c.l.b16 %v263
    %v335 = vunpack.c.l.b16 %v264
    %v336 = vunpack.c.l.b16 %v265
    %v337 = vunpack.c.l.b16 %v266
    %v338 = vunpack.c.l.b16 %v267
    %v339 = vunpack.c.l.b16 %v268
    %v340 = vunpack.c.l.b16 %v269
    %v341 = vunpack.c.l.b16 %v270
    %v342 = vunpack.c.l.b16 %v271
    %v343 = vunpack.c.l.b16 %v272
    %v344 = vunpack.c.l.b16 %v273
    %v345 = vunpack.c.l.b16 %v274
    %v346 = vunpack.c.l.b16 %v275
    %v347 = vunpack.c.l.b16 %v276
    %v348 = vunpack.c.l.b16 %v277
    %v349 = vpack.c.b16 %v318, %v317
    %v350 = vpack.c.b16 %v320, %v319
    %v351 = vpack.c.b16 %v322, %v321
    %v352 = vpack.c.b16 %v324, %v323
    %v353 = vpack.c.b16 %v326, %v325
    %v354 = vpack.c.b16 %v328, %v327
    %v355 = vpack.c.b16 %v330, %v329
    %v356 = vpack.c.b16 %v332, %v331
    %v357 = vpack.c.b16 %v334, %v333
    %v358 = vpack.c.b16 %v336, %v335
    %v359 = vpack.c.b16 %v338, %v337
    %v360 = vpack.c.b16 %v340, %v339
    %v361 = vpack.c.b16 %v342, %v341
    %v362 = vpack.c.b16 %v344, %v343
    %v363 = vpack.c.b16 %v346, %v345
    %v364 = vpack.c.b16 %v348, %v347
    %381 = vmatprep.subr.bf16.mxu0 0
    %382 = vmatpush1.bf16.msra.mxu0 %v349
    %383 = vmatprep.subr.bf16.mxu0 0
    %384 = vmatpush1.bf16.msra.mxu0 %v350
    %385 = vmatprep.subr.bf16.mxu0 0
    %386 = vmatpush1.bf16.msra.mxu0 %v351
    %387 = vmatprep.subr.bf16.mxu0 0
    %388 = vmatpush1.bf16.msra.mxu0 %v352
    %389 = vmatprep.subr.bf16.mxu0 0
    %390 = vmatpush1.bf16.msra.mxu0 %v353
    %391 = vmatprep.subr.bf16.mxu0 0
    %392 = vmatpush1.bf16.msra.mxu0 %v354
    %393 = vmatprep.subr.bf16.mxu0 0
    %394 = vmatpush1.bf16.msra.mxu0 %v355
    %395 = vmatprep.subr.bf16.mxu0 0
    %396 = vmatpush1.bf16.msra.mxu0 %v356
    %397 = vmatprep.subr.bf16.mxu0 0
    %398 = vmatpush1.bf16.msra.mxu0 %v357
    %399 = vmatprep.subr.bf16.mxu0 0
    %400 = vmatpush1.bf16.msra.mxu0 %v358
    %401 = vmatprep.subr.bf16.mxu0 0
    %402 = vmatpush1.bf16.msra.mxu0 %v359
    %403 = vmatprep.subr.bf16.mxu0 0
    %404 = vmatpush1.bf16.msra.mxu0 %v360
    %405 = vmatprep.subr.bf16.mxu0 0
    %406 = vmatpush1.bf16.msra.mxu0 %v361
    %407 = vmatprep.subr.bf16.mxu0 0
    %408 = vmatpush1.bf16.msra.mxu0 %v362
    %409 = vmatprep.subr.bf16.mxu0 0
    %410 = vmatpush1.bf16.msra.mxu0 %v363
    %411 = vmatprep.subr.bf16.mxu0 0
    %412 = vmatpush1.bf16.msra.mxu0 %v364
    %413 = vmatprep.mubr.bf16.mxu0 %v245
    %414 = vmatmul.mubr.bf16.gmra.mrb[0].mxu0 %v244
    %v415 = vpop.f32.mrb[0].mxu0
    %v416 = vadd.f32 %v283, %v415
    %v417 = vpop.f32.mrb[0].mxu0
    %v418 = vpop.f32.mrb[0].mxu0
    %v419 = vpop.f32.mrb[0].mxu0
    %420 = vdwg.mxu0
    %v421 = vmax.f32 %v416, 0.0
    %v422 = vpack.c.bf16 %v421, %v421
    %v423 = vld [vmem:[#allocation11] sm:$0xf]
    %v424 = vld [vmem:[#allocation11 + $0x4] sm:$0xf]
    %v425 = vld [vmem:[#allocation11 + $0x8] sm:$0xf]
    %v426 = vld [vmem:[#allocation11 + $0xc] sm:$0xf]
    %v427 = vld [vmem:[#allocation11 + $0x10] sm:$0xf]
    %v428 = vld [vmem:[#allocation11 + $0x14] sm:$0xf]
    %v429 = vld [vmem:[#allocation11 + $0x18] sm:$0xf]
    %v430 = vld [vmem:[#allocation11 + $0x1c] sm:$0xf]
    %v431 = vld [vmem:[#allocation13] sm:$0x1]
    %v433 = vlaneseq
    %v434 = vshrl.u32 %v433, 7
    %v435 = vsub.s32 0, %v434
    %v436 = vrot.slane %v431, %v435
    %v446 = vunpack.c.l.b16 %v423
    %v447 = vunpack.c.l.b16 %v424
    %v448 = vunpack.c.l.b16 %v425
    %v449 = vunpack.c.l.b16 %v426
    %v450 = vunpack.c.l.b16 %v427
    %v451 = vunpack.c.l.b16 %v428
    %v452 = vunpack.c.l.b16 %v429
    %v453 = vunpack.c.l.b16 %v430
    %v454 = vpack.c.b16 %v447, %v446
    %v455 = vpack.c.b16 %v449, %v448
    %v456 = vpack.c.b16 %v451, %v450
    %v457 = vpack.c.b16 %v453, %v452
    %vm462 = vcmask 523264
    %v464 = vsel %vm462, %v422, 0
    %466 = vmatprep.subr.bf16.mxu0 0
    %467 = vmatpush1.bf16.msra.mxu0 %v454
    %468 = vmatprep.subr.bf16.mxu0 0
    %469 = vmatpush1.bf16.msra.mxu0 %v455
    %470 = vmatprep.subr.bf16.mxu0 0
    %471 = vmatpush1.bf16.msra.mxu0 %v456
    %472 = vmatprep.subr.bf16.mxu0 0
    %473 = vmatpush1.bf16.msra.mxu0 %v457
    %474 = vmatprep.subr.bf16.mxu0 0
    %475 = vmatpush1.bf16.msra.mxu0 0
    %476 = vmatprep.subr.bf16.mxu0 0
    %477 = vmatpush1.bf16.msra.mxu0 0
    %478 = vmatprep.subr.bf16.mxu0 0
    %479 = vmatpush1.bf16.msra.mxu0 0
    %480 = vmatprep.subr.bf16.mxu0 0
    %481 = vmatpush1.bf16.msra.mxu0 0
    %482 = vmatprep.subr.bf16.mxu0 0
    %483 = vmatpush1.bf16.msra.mxu0 0
    %484 = vmatprep.subr.bf16.mxu0 0
    %485 = vmatpush1.bf16.msra.mxu0 0
    %486 = vmatprep.subr.bf16.mxu0 0
    %487 = vmatpush1.bf16.msra.mxu0 0
    %488 = vmatprep.subr.bf16.mxu0 0
    %489 = vmatpush1.bf16.msra.mxu0 0
    %490 = vmatprep.subr.bf16.mxu0 0
    %491 = vmatpush1.bf16.msra.mxu0 0
    %492 = vmatprep.subr.bf16.mxu0 0
    %493 = vmatpush1.bf16.msra.mxu0 0
    %494 = vmatprep.subr.bf16.mxu0 0
    %495 = vmatpush1.bf16.msra.mxu0 0
    %496 = vmatprep.subr.bf16.mxu0 0
    %497 = vmatpush1.bf16.msra.mxu0 0
    %498 = vmatprep.mubr.bf16.mxu0 0
    %499 = vmatmul.mubr.bf16.gmra.mrb[0].mxu0 %v464
    %v500 = vpop.f32.mrb[0].mxu0
    %v501 = vadd.f32 %v436, %v500
    %v502 = vpop.f32.mrb[0].mxu0
    %v503 = vpop.f32.mrb[0].mxu0
    %v504 = vpop.f32.mrb[0].mxu0
    %505 = vdwg.mxu0
    %vm506 = vcmask 15360
    %507 = vst.msk [vmem:[#allocation14] sm:$0xff] %vm506, %v501
    // Predicated region
    $region58: #{ecgnet_forward.1} parent=1 // pred_check
      _
    $region59: #{ecgnet_forward.1} parent=1 // pred_check_branch
      %509 = sbr.rel (0) target = $region61
    $region60: #{ecgnet_forward.1} parent=1 // pred_region
      %s511 = ssub.s32 128, 128
      %512 = vsyncadd [#allocation4], %s511
      %s514 = sshll.u32 [#allocation14], 4
      %s515 = int_to_ptr.vmem [resolvable:$true] %s514
      %517 = dma.vmem_to_hbm [thread:$0]  %s515, 128, %s7, [#allocation4]
    $region61: #{ecgnet_forward.1} parent=1 // pred_fallthru
      _
    // Predicated region
    $region62: #{ecgnet_forward.1} parent=1 // pred_check
      _
    $region63: #{ecgnet_forward.1} parent=1 // pred_check_branch
      %519 = sbr.rel (0) target = $region65
    $region64: #{ecgnet_forward.1} parent=1 // pred_region
      %520 = dma.done [#allocation4], 128
    $region65: #{ecgnet_forward.1} parent=1 // pred_fallthru
      _
    %521 = vsyncpa [#allocation3], 1
    %522 = vsyncpa [#allocation6], 1
    %523 = vsyncpa [#allocation9], 1
    %524 = vsyncpa [#allocation12], 1
    %525 = vsyncpa [#allocation4], 1

</llo_original>
